<compile_context>
chip_gen: v7x
topology: tpu7x:2x2x1
jax: 0.10.0
libtpu: 0.0.40
codegen_flags: <defaults>
</compile_context>

<pallas_src>
import functools
from typing import NamedTuple

import jax
import jax.numpy as jnp
from jax.experimental import pallas as pl
from jax.experimental.pallas import tpu as pltpu


def _round_up(n, m):
    return (n + m - 1) // m * m


def _cdiv(a, b):
    return (a + b - 1) // b


# ----------------------------------------------------------------------------- kernels
def _ffn_kernel_inplace(x_ref, w1_ref, w2_ref, beff_ref, o_ref):
    """f32 output: accumulate partial sums of the second matmul directly into o_ref."""
    j = pl.program_id(1)

    @pl.when(j == 0)
    def _():
        o_ref[...] = jnp.zeros_like(o_ref)

    # First linear for this d_ff chunk: (tm, in_p) @ (in_p, tf) -> f32 (MXU).
    h = jnp.dot(x_ref[...], w1_ref[...], preferred_element_type=jnp.float32)
    # Second linear partial sum over this d_ff chunk; f32 accumulation in the output block.
    o_ref[...] += jnp.dot(h.astype(w2_ref.dtype), w2_ref[...],
                          preferred_element_type=jnp.float32)

    @pl.when(j == pl.num_programs(1) - 1)
    def _():
        # Folded bias (b1 @ W2 + b2) + final ReLU.
        o_ref[...] = jnp.maximum(o_ref[...] + beff_ref[...], 0.0)


def _ffn_kernel_scratch(x_ref, w1_ref, w2_ref, beff_ref, o_ref, acc_ref):
    """Non-f32 output: f32 VMEM accumulator, single cast at the final store."""
    j = pl.program_id(1)

    @pl.when(j == 0)
    def _():
        acc_ref[...] = jnp.zeros_like(acc_ref)

    h = jnp.dot(x_ref[...], w1_ref[...], preferred_element_type=jnp.float32)
    acc_ref[...] += jnp.dot(h.astype(w2_ref.dtype), w2_ref[...],
                            preferred_element_type=jnp.float32)

    @pl.when(j == pl.num_programs(1) - 1)
    def _():
        y = acc_ref[...] + beff_ref[...]
        o_ref[...] = jnp.maximum(y, 0.0).astype(o_ref.dtype)


# ----------------------------------------------------------------------- params (hoisted)
class FFNParams(NamedTuple):
    w1: jax.Array      # (in_p, d_ff_p), compute dtype, padded once
    w2: jax.Array      # (d_ff_p, out_p), compute dtype, padded once
    b_eff: jax.Array   # (1, out_p) f32 = b1 @ W2 + b2, padded once
    in_dim: int
    out_dim: int


def prepare_params(w1, b1, w2, b2, *, compute_dtype=None):
    """One-time weight prep (hoisted out of the per-call hot path).

    Pads feature axes to multiples of 128, casts the matmul operands to `compute_dtype`
    (bf16 by default for f32 weights -> full-rate MXU), and folds b1 into an effective
    output bias: (x@W1 + b1)@W2 + b2 == x@W1@W2 + (b1@W2 + b2)  (exact, no activation
    between the two linears).
    """
    w1 = jnp.asarray(w1)
    w2 = jnp.asarray(w2)
    in_dim, d_ff = w1.shape
    out_dim = w2.shape[1]
    if compute_dtype is None:
        # f32 matmuls are multi-pass on the MXU; bf16 operands (f32 accumulate) are 3-6x
        # faster.  Accuracy tradeoff: pass compute_dtype=jnp.float32 for the exact path.
        compute_dtype = jnp.bfloat16 if w1.dtype == jnp.float32 else w1.dtype

    b1f = jnp.asarray(b1).reshape(1, d_ff).astype(jnp.float32)
    b2f = jnp.asarray(b2).reshape(1, out_dim).astype(jnp.float32)
    b_eff = b1f @ w2.astype(jnp.float32) + b2f          # exact fold, done once in f32

    in_p = _round_up(in_dim, 128)
    out_p = _round_up(out_dim, 128)
    d_ff_p = _round_up(d_ff, 128)

    w1p = jnp.pad(w1.astype(compute_dtype), ((0, in_p - in_dim), (0, d_ff_p - d_ff)))
    w2p = jnp.pad(w2.astype(compute_dtype), ((0, d_ff_p - d_ff), (0, out_p - out_dim)))
    b_eff_p = jnp.pad(b_eff, ((0, 0), (0, out_p - out_dim)))
    return FFNParams(w1=w1p, w2=w2p, b_eff=b_eff_p, in_dim=in_dim, out_dim=out_dim)


# ------------------------------------------------------------------- tile / VMEM sizing
def _tpu_vmem_info():
    """Returns (physical VMEM bytes per core, likely_dual_tensorcore)."""
    cap = None
    try:
        info = pltpu.get_tpu_info()
        for attr in ("vmem_capacity_bytes", "vmem_size_bytes", "vmem_bytes"):
            v = getattr(info, attr, None)
            if v:
                cap = int(v)
                break
    except Exception:
        cap = None
    kind = ""
    try:
        kind = jax.devices()[0].device_kind.lower()
    except Exception:
        pass
    if cap is None:
        if any(t in kind for t in ("v4", "v5", "v6")):
            cap = 128 * 1024 * 1024
        else:
            cap = 64 * 1024 * 1024          # conservative default (v7x-sized)
    two_tc = ("v7" in kind) or cap <= 80 * 1024 * 1024
    return cap, two_tc


def _step_vmem_bytes(tm, tf, in_p, out_p, cs, out_itemsize, use_scratch):
    """Approximate VMEM bytes live for one grid step (double-buffered pipelined inputs)."""
    x_b = 2 * tm * in_p * cs                 # x row tile
    w1_b = 2 * in_p * tf * cs                # W1 d_ff slab
    w2_b = 2 * tf * out_p * cs               # W2 d_ff slab
    b_b = 2 * out_p * 4                      # folded bias (tiny)
    o_b = 2 * tm * out_p * out_itemsize      # output block
    acc_b = tm * out_p * 4 if use_scratch else 0
    h_b = (4 + cs) * tm * tf                 # f32 intermediate h + its cast for the 2nd dot
    return x_b + w1_b + w2_b + b_b + o_b + acc_b + h_b


def _select_tiles(M, in_p, out_p, d_ff_p, cs, out_itemsize, use_scratch):
    cap, two_tc = _tpu_vmem_info()
    vmem_limit = (cap * 3) // 4              # ~96 MiB on 128-MiB chips, ~48 MiB on v7x
    budget = vmem_limit - 6 * 1024 * 1024    # headroom for compiler-internal scratch

    # Sub-32-bit blocks pack along sublanes: keep row tiles aligned to the packing factor.
    row_align = 8 * max(1, 4 // cs, 4 // out_itemsize)

    # Row tile: as large as the chip affords (arithmetic intensity ~ tm flop/byte), but
    # (a) split so dual-TC chips get a 'parallel' grid axis of extent >= 2 when M allows,
    # (b) balanced so row-padding waste stays small.
    tm_target = 448 if two_tc else 768
    n_rows = max(1, _cdiv(M, tm_target))
    if two_tc and M > row_align:
        n_rows = max(n_rows, 2)
    tm = max(row_align, _round_up(_cdiv(M, n_rows), row_align))

    # d_ff tile: largest multiple of 128 that divides d_ff_p, is <= 1024 and fits VMEM.
    q = d_ff_p // 128
    tf = 128
    for d in range(q, 0, -1):
        if q % d:
            continue
        cand = 128 * d
        if cand <= 1024 and _step_vmem_bytes(tm, cand, in_p, out_p, cs,
                                             out_itemsize, use_scratch) <= budget:
            tf = cand
            break
    # If even the smallest d_ff slab overflows (very large in_dim/out_dim), shrink rows.
    while tm > row_align and _step_vmem_bytes(tm, tf, in_p, out_p, cs,
                                              out_itemsize, use_scratch) > budget:
        tm = max(row_align, _round_up(tm // 2, row_align))
    # TODO(synk): tile out_p as a third grid axis for extremely large out_dim.
    return tm, tf, int(vmem_limit)


# ------------------------------------------------------------------------------ wrapper
def feed_forward_network(x, params: FFNParams):
    """Computes relu((x @ W1 + b1) @ W2 + b2) for x of shape (..., in_dim)."""
    in_dim, out_dim = params.in_dim, params.out_dim
    assert x.shape[-1] == in_dim
    lead = x.shape[:-1]
    out_dtype = x.dtype

    in_p, d_ff_p = params.w1.shape
    out_p = params.w2.shape[1]
    cs = jnp.dtype(params.w1.dtype).itemsize
    out_itemsize = jnp.dtype(out_dtype).itemsize
    use_inplace = jnp.dtype(out_dtype) == jnp.dtype(jnp.float32)

    x2d = x.reshape(-1, in_dim)
    M = x2d.shape[0]

    tm, tf, vmem_limit = _select_tiles(M, in_p, out_p, d_ff_p, cs,
                                       out_itemsize, not use_inplace)
    m_p = _round_up(M, tm)

    # Activation padding/cast is per-call (x changes every call); weights were padded once.
    xp = jnp.pad(x2d.astype(params.w1.dtype), ((0, m_p - M), (0, in_p - in_dim)))

    grid = (m_p // tm, d_ff_p // tf)         # rows parallel, d_ff reduction last

    kernel = _ffn_kernel_inplace if use_inplace else _ffn_kernel_scratch
    scratch = [] if use_inplace else [pltpu.VMEM((tm, out_p), jnp.float32)]

    out = pl.pallas_call(
        kernel,
        out_shape=jax.ShapeDtypeStruct((m_p, out_p), out_dtype),
        grid_spec=pltpu.PrefetchScalarGridSpec(
            num_scalar_prefetch=0,
            grid=grid,
            in_specs=[
                pl.BlockSpec((tm, in_p), lambda i, j: (i, 0)),    # x row tile (reused over j)
                pl.BlockSpec((in_p, tf), lambda i, j: (0, j)),    # W1 d_ff slab
                pl.BlockSpec((tf, out_p), lambda i, j: (j, 0)),   # W2 d_ff slab
                pl.BlockSpec((1, out_p), lambda i, j: (0, 0)),    # folded bias (constant)
            ],
            out_specs=pl.BlockSpec((tm, out_p), lambda i, j: (i, 0)),
            scratch_shapes=scratch,
        ),
        compiler_params=pltpu.CompilerParams(
            dimension_semantics=("parallel", "arbitrary"),
            vmem_limit_bytes=vmem_limit,
        ),
    )(xp, params.w1, params.w2, params.b_eff)

    return out[:M, :out_dim].reshape(*lead, out_dim)


def init_params(key, in_dim, d_ff, out_dim, dtype=jnp.float32):
    """Deterministic init mimicking nn.Linear's uniform(-1/sqrt(fan_in), 1/sqrt(fan_in))."""
    k1, k2, k3, k4 = jax.random.split(key, 4)
    lim1 = 1.0 / (in_dim ** 0.5)
    lim2 = 1.0 / (d_ff ** 0.5)
    w1 = jax.random.uniform(k1, (in_dim, d_ff), dtype, -lim1, lim1)
    b1 = jax.random.uniform(k2, (d_ff,), dtype, -lim1, lim1)
    w2 = jax.random.uniform(k3, (d_ff, out_dim), dtype, -lim2, lim2)
    b2 = jax.random.uniform(k4, (out_dim,), dtype, -lim2, lim2)
    return w1, b1, w2, b2


if __name__ == "__main__":
    batch, seq, in_dim, d_ff, out_dim = 2, 8, 32, 64, 32

    key = jax.random.PRNGKey(0)
    kx, kp = jax.random.split(key)
    x = jax.random.normal(kx, (batch, seq, in_dim), jnp.float32)
    w1, b1, w2, b2 = init_params(kp, in_dim, d_ff, out_dim)

    # Pure-JAX f32 references (PyTorch-order, and the exactly-equivalent folded-bias order).
    ref = jnp.maximum((x @ w1 + b1) @ w2 + b2, 0.0)
    ref_folded = jnp.maximum((x @ w1) @ w2 + (b1.reshape(1, -1) @ w2 + b2), 0.0)

    # Exact f32 operand path: tight check against the same-association reference.
    params_f32 = prepare_params(w1, b1, w2, b2, compute_dtype=jnp.float32)
    y_f32 = feed_forward_network(x, params_f32)
    jax.block_until_ready(y_f32)
    assert y_f32.shape == (batch, seq, out_dim)
    assert jnp.allclose(y_f32, ref_folded, atol=1e-4, rtol=1e-4), "f32 path mismatch"
    assert jnp.allclose(y_f32, ref, atol=1e-2, rtol=1e-2), "f32 path mismatch vs torch-order"

    # Default (bf16 MXU operands, f32 accumulation) path: bf16-level tolerance.
    params_bf16 = prepare_params(w1, b1, w2, b2)          # compute_dtype -> bf16
    y_bf16 = feed_forward_network(x, params_bf16)
    jax.block_until_ready(y_bf16)
    assert jnp.allclose(y_bf16, ref, atol=5e-2, rtol=5e-2), "bf16 path mismatch"

    # bf16 activations/outputs exercise the scratch-accumulator variant.
    y_b = feed_forward_network(x.astype(jnp.bfloat16), params_bf16)
    jax.block_until_ready(y_b)
    assert jnp.allclose(y_b.astype(jnp.float32), ref, atol=1e-1, rtol=1e-1), "bf16-out mismatch"

    print("KERNEL_OK")
</pallas_src>

<mosaic_0001>
module attributes {stable_mosaic.version = 11 : i64} {
  func.func @_ffn_kernel_inplace(%arg0: i32, %arg1: i32, %arg2: memref<8x128xf32, #tpu.memory_space<vmem>>, %arg3: memref<128x128xf32, #tpu.memory_space<vmem>>, %arg4: memref<128x128xf32, #tpu.memory_space<vmem>>, %arg5: memref<1x128xf32, #tpu.memory_space<vmem>>, %arg6: memref<8x128xf32, #tpu.memory_space<vmem>>) attributes {dimension_semantics = [#tpu.dimension_semantics<parallel>, #tpu.dimension_semantics<arbitrary>], iteration_bounds = array<i64: 2, 1>, scalar_prefetch = 0 : i64, scratch_operands = 0 : i64, tpu.core_type = #tpu.core_type<tc>, window_params = [{transform_indices = @transform_0, window_bounds = array<i64: 8, 128>}, {transform_indices = @transform_1, window_bounds = array<i64: 128, 128>}, {transform_indices = @transform_2, window_bounds = array<i64: 128, 128>}, {pipeline_mode = #tpu.pipeline_mode<synchronous>, transform_indices = @transform_3, window_bounds = array<i64: 1, 128>}, {transform_indices = @transform_4, window_bounds = array<i64: 8, 128>}]} {
    %c0_i32 = arith.constant 0 : i32
    %0 = arith.cmpi eq, %arg1, %c0_i32 : i32
    %1 = arith.extui %0 : i1 to i32
    %c0_i32_0 = arith.constant 0 : i32
    %2 = arith.cmpi ne, %1, %c0_i32_0 : i32
    scf.if %2 {
      %cst_13 = arith.constant 0.000000e+00 : f32
      %14 = vector.broadcast %cst_13 : f32 to vector<8x128xf32>
      %c0_14 = arith.constant 0 : index
      %c0_15 = arith.constant 0 : index
      %15 = vector.load %arg6[%c0_14, %c0_15] : memref<8x128xf32, #tpu.memory_space<vmem>>, vector<8x128xf32>
      tpu.vector_store %arg6[%c0_14, %c0_15], %14 {strides = array<i32>} : memref<8x128xf32, #tpu.memory_space<vmem>>, vector<8x128xf32>,
    } else {
    }
    %c0 = arith.constant 0 : index
    %c0_1 = arith.constant 0 : index
    %3 = vector.load %arg2[%c0, %c0_1] : memref<8x128xf32, #tpu.memory_space<vmem>>, vector<8x128xf32>
    %c0_2 = arith.constant 0 : index
    %c0_3 = arith.constant 0 : index
    %4 = vector.load %arg3[%c0_2, %c0_3] : memref<128x128xf32, #tpu.memory_space<vmem>>, vector<128x128xf32>
    %cst = arith.constant dense<0.000000e+00> : vector<8x128xf32>
    %5 = tpu.matmul %3, %4, %cst {dimension_numbers = #tpu.dot_dimension_numbers<[1], [0], [0], [1], [0, 0, 1, 1], [], []>} : vector<8x128xf32>, vector<128x128xf32>, vector<8x128xf32> -> vector<8x128xf32>
    %c0_4 = arith.constant 0 : index
    %c0_5 = arith.constant 0 : index
    %6 = vector.load %arg6[%c0_4, %c0_5] : memref<8x128xf32, #tpu.memory_space<vmem>>, vector<8x128xf32>
    %c0_6 = arith.constant 0 : index
    %c0_7 = arith.constant 0 : index
    %7 = vector.load %arg4[%c0_6, %c0_7] : memref<128x128xf32, #tpu.memory_space<vmem>>, vector<128x128xf32>
    %cst_8 = arith.constant dense<0.000000e+00> : vector<8x128xf32>
    %8 = tpu.matmul %5, %7, %cst_8 {dimension_numbers = #tpu.dot_dimension_numbers<[1], [0], [0], [1], [0, 0, 1, 1], [], []>} : vector<8x128xf32>, vector<128x128xf32>, vector<8x128xf32> -> vector<8x128xf32>
    %9 = arith.addf %6, %8 : vector<8x128xf32>
    %c0_9 = arith.constant 0 : index
    %c0_10 = arith.constant 0 : index
    %10 = vector.load %arg6[%c0_9, %c0_10] : memref<8x128xf32, #tpu.memory_space<vmem>>, vector<8x128xf32>
    tpu.vector_store %arg6[%c0_9, %c0_10], %9 {strides = array<i32>} : memref<8x128xf32, #tpu.memory_space<vmem>>, vector<8x128xf32>,
    %c0_i32_11 = arith.constant 0 : i32
    %11 = arith.cmpi eq, %arg1, %c0_i32_11 : i32
    %12 = arith.extui %11 : i1 to i32
    %c0_i32_12 = arith.constant 0 : i32
    %13 = arith.cmpi ne, %12, %c0_i32_12 : i32
    scf.if %13 {
      %c0_13 = arith.constant 0 : index
      %c0_14 = arith.constant 0 : index
      %14 = vector.load %arg6[%c0_13, %c0_14] : memref<8x128xf32, #tpu.memory_space<vmem>>, vector<8x128xf32>
      %c0_15 = arith.constant 0 : index
      %c0_16 = arith.constant 0 : index
      %15 = vector.load %arg5[%c0_15, %c0_16] : memref<1x128xf32, #tpu.memory_space<vmem>>, vector<1x128xf32>
      %16 = vector.broadcast %15 : vector<1x128xf32> to vector<8x128xf32>
      %17 = arith.addf %14, %16 : vector<8x128xf32>
      %cst_17 = arith.constant 0.000000e+00 : f32
      %18 = vector.broadcast %cst_17 : f32 to vector<8x128xf32>
      %19 = arith.maximumf %17, %18 : vector<8x128xf32>
      %c0_18 = arith.constant 0 : index
      %c0_19 = arith.constant 0 : index
      %20 = vector.load %arg6[%c0_18, %c0_19] : memref<8x128xf32, #tpu.memory_space<vmem>>, vector<8x128xf32>
      tpu.vector_store %arg6[%c0_18, %c0_19], %19 {strides = array<i32>} : memref<8x128xf32, #tpu.memory_space<vmem>>, vector<8x128xf32>,
    } else {
    }
    return
  }
  func.func @transform_0(%arg0: i32, %arg1: i32) -> (i32, i32) {
    %c0_i32 = arith.constant 0 : i32
    %c0_i32_0 = arith.constant 0 : i32
    return %arg0, %c0_i32 : i32, i32
  }
  func.func @transform_1(%arg0: i32, %arg1: i32) -> (i32, i32) {
    %c0_i32 = arith.constant 0 : i32
    %c0_i32_0 = arith.constant 0 : i32
    return %c0_i32, %arg1 : i32, i32
  }
  func.func @transform_2(%arg0: i32, %arg1: i32) -> (i32, i32) {
    %c0_i32 = arith.constant 0 : i32
    %c0_i32_0 = arith.constant 0 : i32
    return %arg1, %c0_i32 : i32, i32
  }
  func.func @transform_3(%arg0: i32, %arg1: i32) -> (i32, i32) {
    %c0_i32 = arith.constant 0 : i32
    %c0_i32_0 = arith.constant 0 : i32
    %c0_i32_1 = arith.constant 0 : i32
    return %c0_i32, %c0_i32_0 : i32, i32
  }
  func.func @transform_4(%arg0: i32, %arg1: i32) -> (i32, i32) {
    %c0_i32 = arith.constant 0 : i32
    %c0_i32_0 = arith.constant 0 : i32
    return %arg0, %c0_i32 : i32, i32
  }
}

</mosaic_0001>

<llo_original>
// kernel: tpu_custom_call.1
$region0: #{tpu_custom_call.1}
  #allocation0 [shape = 'u32[]', space=smem, size = 0x4, offset = 0x4, fixed_abs, tag = 'smem constant byte address 0x4 - core index']
  #allocation1 [shape = 'u32[144,128]{1,0:T(1,128)}', space=vmem, size = 0x12000, scoped, tag = 'internal scratch']
  %s0 = inlined_call_operand.hbm [shape: f32[16,128], index: 0, kind: input, shape index: {}]
  %s1 = inlined_call_operand.hbm [shape: f32[128,128], index: 1, kind: input, shape index: {}]
  %s2 = inlined_call_operand.hbm [shape: f32[128,128], index: 2, kind: input, shape index: {}]
  %s3 = inlined_call_operand.vmem [shape: f32[1,128], index: 3, kind: input, shape index: {}]
  %s4 = inlined_call_operand.hbm [shape: f32[16,128], index: 4, kind: output, shape index: {}]
  %s5 = sld [smem:[#allocation0]]
  $region69: #{tpu_custom_call.1} parent=0
    _
  %s7 = ssub.s32 1, %s5
  %s8 = scalar_select 0, %s7, %s5
  $region1: #{tpu_custom_call.1} parent=0
    #allocation2 [shape = 'u8[8192]{0}', space=vmem, size = 0x2000, scoped, tag = 'input window, operand 0']
    #allocation3 [shape = 's32[2]{0}', space=sflag, size = 0x8, scoped, tag = 'scoped memory for tpu_custom_call.1']
    #allocation4 [shape = 's32[2]{0}', space=sflag, size = 0x8, scoped, tag = 'scoped memory for tpu_custom_call.1']
    #allocation5 [shape = 'u8[65536]{0}', space=vmem, size = 0x10000, scoped, tag = 'input window, operand 1, single buffered']
    #allocation6 [shape = 's32[1]{0}', space=sflag, size = 0x4, scoped, tag = 'scoped memory for tpu_custom_call.1']
    #allocation7 [shape = 'u8[65536]{0}', space=vmem, size = 0x10000, scoped, tag = 'input window, operand 2, single buffered']
    #allocation8 [shape = 'u8[8192]{0}', space=vmem, size = 0x2000, scoped, tag = 'output window, operand 0']
    %9 = vsyncpa [#allocation3], 0
    %s10 = scalar_lea.sflag [#allocation3], 1
    %11 = vsyncpa %s10, 0
    %12 = vsyncpa [#allocation6], 0
    %13 = vsyncpa [#allocation4], 0
    %s14 = scalar_lea.sflag [#allocation4], 1
    %15 = vsyncpa %s14, 0
    loop: start=0, step=1, limit=4
    $region2: #{tpu_custom_call.1} parent=1 // loop_pre_header
      _
    $region3: #{tpu_custom_call.1} parent=1 // loop_header
      %s17 = sphi 0, %s21
      %p18 = scmp.ge.s32.totalorder %s17, 4
      %s24 = sphi 0, %s36
      %s25 = sphi 0, %s32
      %s26 = sphi 0, %s24
      %s27 = sphi 0, %s25
      %s28 = sphi 0, %s26
      %s29 = sphi 0, %s27
      %s39 = sphi 0, %s41
      %s42 = sphi 0, %s39
      %s43 = sphi 0, %s42
      %s59 = sphi 0, %s43
      %s65 = sphi 0, %s67
      %s68 = sphi 0, %s65
      %s69 = sphi 0, %s68
      %s85 = sphi 0, %s69
      %s91 = sphi 0, %s93
      %s94 = sphi 0, %s91
      %s95 = sphi 0, %s94
      %s111 = sphi 0, %s95
      %s115 = sphi 0, %s115
      %s117 = sphi 0, %s115
      %s118 = sphi 0, %s117
      %s132 = sphi 0, %s118
      %s138 = sphi 0, %s140
      %s141 = sphi 0, %s138
      %s142 = sphi 0, %s141
      %s158 = sphi 0, %s142
    $region4: #{tpu_custom_call.1} parent=1 // loop_header_branch
      %20 = sbr.rel (%p18) target = $region8
    $region5: #{tpu_custom_call.1} parent=1 // loop_body
      %s22 = ssub.s32 %s17, 1
      %s23 = ssub.s32 %s17, 2
      %s30 = sadd.s32 1, %s25
      %p31 = scmp.ge.s32.totalorder %s30, 1
      %s32 = scalar_select %p31, 0, %s30
      %s33 = sadd.s32 1, %s24
      %s34 = scalar_select %p31, %s33, %s24
      %p35 = scmp.ge.s32.totalorder %s34, 2
      %s36 = scalar_select %p35, 0, %s34
      %s37 = ssub.s32 %s24, %s36
      %p38 = scmp.eq.s32.totalorder %s37, 0
      %s40 = sadd.s32 %s39, 1
      %s41 = scalar_select %p38, %s39, %s40
      %p44 = pneg %p38
      %p45 = scmp.eq.s32.totalorder %s17, 1
      %p46 = por %p44, %p45
      %p47 = scmp.ne.s32.totalorder %s39, %s42
      %p48 = scmp.eq.s32.totalorder %s17, 0
      %p49 = por %p47, %p48
      %p50 = scmp.ne.s32.totalorder %s39, %s42
      %p51 = scmp.eq.s32.totalorder %s22, 1
      %p52 = por %p50, %p51
      %p53 = scmp.ne.s32.totalorder %s42, %s43
      %p54 = scmp.eq.s32.totalorder %s22, 0
      %p55 = por %p53, %p54
      %p56 = scmp.ne.s32.totalorder %s42, %s43
      %p57 = scmp.eq.s32.totalorder %s23, 1
      %p58 = por %p56, %p57
      %p60 = scmp.ne.s32.totalorder %s43, %s59
      %p61 = scmp.eq.s32.totalorder %s23, 0
      %p62 = por %p60, %p61
      %s63 = ssub.s32 %s25, %s32
      %p64 = scmp.eq.s32.totalorder %s63, 0
      %s66 = sadd.s32 %s65, 1
      %s67 = scalar_select %p64, %s65, %s66
      %p70 = pneg %p64
      %p71 = scmp.eq.s32.totalorder %s17, 1
      %p72 = por %p70, %p71
      %p73 = scmp.ne.s32.totalorder %s65, %s68
      %p74 = scmp.eq.s32.totalorder %s17, 0
      %p75 = por %p73, %p74
      %p76 = scmp.ne.s32.totalorder %s65, %s68
      %p77 = scmp.eq.s32.totalorder %s22, 1
      %p78 = por %p76, %p77
      %p79 = scmp.ne.s32.totalorder %s68, %s69
      %p80 = scmp.eq.s32.totalorder %s22, 0
      %p81 = por %p79, %p80
      %p82 = scmp.ne.s32.totalorder %s68, %s69
      %p83 = scmp.eq.s32.totalorder %s23, 1
      %p84 = por %p82, %p83
      %p86 = scmp.ne.s32.totalorder %s69, %s85
      %p87 = scmp.eq.s32.totalorder %s23, 0
      %p88 = por %p86, %p87
      %s89 = ssub.s32 %s25, %s32
      %p90 = scmp.eq.s32.totalorder %s89, 0
      %s92 = sadd.s32 %s91, 1
      %s93 = scalar_select %p90, %s91, %s92
      %p96 = pneg %p90
      %p97 = scmp.eq.s32.totalorder %s17, 1
      %p98 = por %p96, %p97
      %p99 = scmp.ne.s32.totalorder %s91, %s94
      %p100 = scmp.eq.s32.totalorder %s17, 0
      %p101 = por %p99, %p100
      %p102 = scmp.ne.s32.totalorder %s91, %s94
      %p103 = scmp.eq.s32.totalorder %s22, 1
      %p104 = por %p102, %p103
      %p105 = scmp.ne.s32.totalorder %s94, %s95
      %p106 = scmp.eq.s32.totalorder %s22, 0
      %p107 = por %p105, %p106
      %p108 = scmp.ne.s32.totalorder %s94, %s95
      %p109 = scmp.eq.s32.totalorder %s23, 1
      %p110 = por %p108, %p109
      %p112 = scmp.ne.s32.totalorder %s95, %s111
      %p113 = scmp.eq.s32.totalorder %s23, 0
      %p114 = por %p112, %p113
      %s116 = sadd.s32 %s115, 1
      %p119 = scmp.eq.s32.totalorder %s17, 1
      %p120 = scmp.ne.s32.totalorder %s115, %s117
      %p121 = scmp.eq.s32.totalorder %s17, 0
      %p122 = por %p120, %p121
      %p123 = scmp.ne.s32.totalorder %s115, %s117
      %p124 = scmp.eq.s32.totalorder %s22, 1
      %p125 = por %p123, %p124
      %p126 = scmp.ne.s32.totalorder %s117, %s118
      %p127 = scmp.eq.s32.totalorder %s22, 0
      %p128 = por %p126, %p127
      %p129 = scmp.ne.s32.totalorder %s117, %s118
      %p130 = scmp.eq.s32.totalorder %s23, 1
      %p131 = por %p129, %p130
      %p133 = scmp.ne.s32.totalorder %s118, %s132
      %p134 = scmp.eq.s32.totalorder %s23, 0
      %p135 = por %p133, %p134
      %s136 = ssub.s32 %s24, %s36
      %p137 = scmp.eq.s32.totalorder %s136, 0
      %s139 = sadd.s32 %s138, 1
      %s140 = scalar_select %p137, %s138, %s139
      %p143 = pneg %p137
      %p144 = scmp.eq.s32.totalorder %s17, 1
      %p145 = por %p143, %p144
      %p146 = scmp.ne.s32.totalorder %s138, %s141
      %p147 = scmp.eq.s32.totalorder %s17, 0
      %p148 = por %p146, %p147
      %p149 = scmp.ne.s32.totalorder %s138, %s141
      %p150 = scmp.eq.s32.totalorder %s22, 1
      %p151 = por %p149, %p150
      %p152 = scmp.ne.s32.totalorder %s141, %s142
      %p153 = scmp.eq.s32.totalorder %s22, 0
      %p154 = por %p152, %p153
      %p155 = scmp.ne.s32.totalorder %s141, %s142
      %p156 = scmp.eq.s32.totalorder %s23, 1
      %p157 = por %p155, %p156
      %p159 = scmp.ne.s32.totalorder %s142, %s158
      %p160 = scmp.eq.s32.totalorder %s23, 0
      %p161 = por %p159, %p160
      %p162 = scmp.le.s32.totalorder 1, %s17
      %p163 = scmp.lt.s32.totalorder %s17, 3
      %p164 = pnand %p162, %p163
      %p165 = pneg %p164
      // Predicated region
      $region9: #{tpu_custom_call.1} parent=5 // pred_check
        _
      $region10: #{tpu_custom_call.1} parent=5 // pred_check_branch
        %167 = sbr.rel (%p164) target = $region12
      $region11: #{tpu_custom_call.1} parent=5 // pred_region
        %s168 = ssub.s32 %s17, 1
        // Predicated region
        $region13: #{tpu_custom_call.1} parent=11 // pred_check
          %p169 = pneg %p81
        $region14: #{tpu_custom_call.1} parent=11 // pred_check_branch
          %171 = sbr.rel (%p169) target = $region16
        $region15: #{tpu_custom_call.1} parent=11 // pred_region
          %s173 = ssub.s32 2048, 2048
          %174 = vsyncadd [#allocation6], %s173
          %s175 = smul.addr %s27, 128
          %s176 = scalar_lea.hbm %s1, %s175
          %s177 = sshll.u32 [#allocation5], 4
          %s178 = int_to_ptr.vmem [resolvable:$true] %s177
          %183 = dma.hbm_to_vmem [thread:$0]  %s176, 2048, %s178, [#allocation6], 128, 128, 8
        $region16: #{tpu_custom_call.1} parent=11 // pred_fallthru
          _
        // Predicated region
        $region17: #{tpu_custom_call.1} parent=11 // pred_check
          %p184 = pneg %p107
        $region18: #{tpu_custom_call.1} parent=11 // pred_check_branch
          %186 = sbr.rel (%p184) target = $region20
        $region19: #{tpu_custom_call.1} parent=11 // pred_region
          %s187 = smul.u32 16, %s27
          %s189 = ssub.s32 2048, 2048
          %190 = vsyncadd [#allocation6], %s189
          %s191 = smul.addr %s187, 128
          %s192 = scalar_lea.hbm %s2, %s191
          %s193 = sshll.u32 [#allocation7], 4
          %s194 = int_to_ptr.vmem [resolvable:$true] %s193
          %199 = dma.hbm_to_vmem [thread:$0]  %s192, 2048, %s194, [#allocation6], 128, 128, 8
        $region20: #{tpu_custom_call.1} parent=11 // pred_fallthru
          _
        // Predicated region
        $region21: #{tpu_custom_call.1} parent=11 // pred_check
          %p200 = pneg %p128
        $region22: #{tpu_custom_call.1} parent=11 // pred_check_branch
          %202 = sbr.rel (%p200) target = $region24
        $region23: #{tpu_custom_call.1} parent=11 // pred_region
          _
        $region24: #{tpu_custom_call.1} parent=11 // pred_fallthru
          _
      $region12: #{tpu_custom_call.1} parent=5 // pred_fallthru
        _
      %p203 = scmp.lt.s32.totalorder %s17, 2
      // Predicated region
      $region25: #{tpu_custom_call.1} parent=5 // pred_check
        %p204 = pneg %p203
      $region26: #{tpu_custom_call.1} parent=5 // pred_check_branch
        %206 = sbr.rel (%p204) target = $region28
      $region27: #{tpu_custom_call.1} parent=5 // pred_region
        // Predicated region
        $region29: #{tpu_custom_call.1} parent=27 // pred_check
          %p207 = pneg %p49
        $region30: #{tpu_custom_call.1} parent=27 // pred_check_branch
          %209 = sbr.rel (%p207) target = $region32
        $region31: #{tpu_custom_call.1} parent=27 // pred_region
          %s210 = sand.u32 %s39, 1
          %s211 = scalar_lea.sflag [#allocation3], %s210
          %s212 = sand.u32 %s39, 1
          %s213 = smul.addr %s212, 8
          %s214 = scalar_lea.vmem [#allocation2], %s213
          %s216 = ssub.s32 128, 128
          %217 = vsyncadd %s211, %s216
          %s218 = smul.addr %s24, 128
          %s219 = scalar_lea.hbm %s0, %s218
          %s221 = sshll.u32 %s214, 4
          %s222 = int_to_ptr.vmem [resolvable:$true] %s221
          %224 = dma.hbm_to_vmem [thread:$0]  %s219, 128, %s222, %s211
        $region32: #{tpu_custom_call.1} parent=27 // pred_fallthru
          _
      $region28: #{tpu_custom_call.1} parent=5 // pred_fallthru
        _
      %p225 = scmp.le.s32.totalorder 1, %s17
      %p226 = scmp.lt.s32.totalorder %s17, 3
      %p227 = pnand %p225, %p226
      %p228 = pneg %p227
      // Predicated region
      $region33: #{tpu_custom_call.1} parent=5 // pred_check
        _
      $region34: #{tpu_custom_call.1} parent=5 // pred_check_branch
        %230 = sbr.rel (%p227) target = $region36
      $region35: #{tpu_custom_call.1} parent=5 // pred_region
        %s231 = ssub.s32 %s17, 1
        %s232 = sand.u32 %s42, 1
        %s233 = scalar_lea.sflag [#allocation3], %s232
        %s234 = sand.u32 %s42, 1
        %s235 = smul.addr %s234, 8
        %s236 = scalar_lea.vmem [#allocation2], %s235
        // Predicated region
        $region37: #{tpu_custom_call.1} parent=35 // pred_check
          %p237 = pneg %p55
        $region38: #{tpu_custom_call.1} parent=35 // pred_check_branch
          %239 = sbr.rel (%p237) target = $region40
        $region39: #{tpu_custom_call.1} parent=35 // pred_region
          %240 = dma.done %s233, 128
        $region40: #{tpu_custom_call.1} parent=35 // pred_fallthru
          _
        // Predicated region
        $region41: #{tpu_custom_call.1} parent=35 // pred_check
          %p241 = pneg %p81
        $region42: #{tpu_custom_call.1} parent=35 // pred_check_branch
          %243 = sbr.rel (%p241) target = $region44
        $region43: #{tpu_custom_call.1} parent=35 // pred_region
          %244 = dma.done [#allocation6], 2048
        $region44: #{tpu_custom_call.1} parent=35 // pred_fallthru
          _
        // Predicated region
        $region45: #{tpu_custom_call.1} parent=35 // pred_check
          %p245 = pneg %p107
        $region46: #{tpu_custom_call.1} parent=35 // pred_check_branch
          %247 = sbr.rel (%p245) target = $region48
        $region47: #{tpu_custom_call.1} parent=35 // pred_region
          %248 = dma.done [#allocation6], 2048
        $region48: #{tpu_custom_call.1} parent=35 // pred_fallthru
          _
        %s249 = sand.u32 %s42, 1
        %s250 = scalar_lea.sflag [#allocation3], %s249
        %s251 = sand.u32 %s42, 1
        %s252 = smul.addr %s251, 8
        %s253 = scalar_lea.vmem [#allocation2], %s252
        %p254 = pneg %p55
        %p255 = pneg %p52
        %p256 = pneg %p81
        %p257 = pneg %p78
        %p258 = pneg %p107
        %p259 = pneg %p104
        %p260 = pneg %p128
        %p261 = pneg %p125
        %p262 = pneg %p154
        %p263 = pneg %p151
        %s264 = sand.u32 %s141, 1
        %s265 = scalar_lea.sflag [#allocation4], %s264
        %s266 = sand.u32 %s141, 1
        %s267 = smul.addr %s266, 8
        %s268 = scalar_lea.vmem [#allocation8], %s267
        %s269 = smul.u32 16, %s27
        %p270 = scmp.eq.s32.totalorder %s27, 0
        // Predicated region
        $region49: #{tpu_custom_call.1} parent=35 // pred_check
          %p271 = pneg %p270
        $region50: #{tpu_custom_call.1} parent=35 // pred_check_branch
          %273 = sbr.rel (%p271) target = $region52
        $region51: #{tpu_custom_call.1} parent=35 // pred_region
          %274 = vst [vmem:[%s268] sm:$0xff] 0.0
        $region52: #{tpu_custom_call.1} parent=35 // pred_fallthru
          _
        %v275 = vld [vmem:[%s236] sm:$0xff]
        %v276 = vld [vmem:[#allocation5] sm:$0xff]
        %v277 = vld [vmem:[#allocation5 + $0x8] sm:$0xff]
        %v278 = vld [vmem:[#allocation5 + $0x10] sm:$0xff]
        %v279 = vld [vmem:[#allocation5 + $0x18] sm:$0xff]
        %v280 = vld [vmem:[#allocation5 + $0x20] sm:$0xff]
        %v281 = vld [vmem:[#allocation5 + $0x28] sm:$0xff]
        %v282 = vld [vmem:[#allocation5 + $0x30] sm:$0xff]
        %v283 = vld [vmem:[#allocation5 + $0x38] sm:$0xff]
        %v284 = vld [vmem:[#allocation5 + $0x40] sm:$0xff]
        %v285 = vld [vmem:[#allocation5 + $0x48] sm:$0xff]
        %v286 = vld [vmem:[#allocation5 + $0x50] sm:$0xff]
        %v287 = vld [vmem:[#allocation5 + $0x58] sm:$0xff]
        %v288 = vld [vmem:[#allocation5 + $0x60] sm:$0xff]
        %v289 = vld [vmem:[#allocation5 + $0x68] sm:$0xff]
        %v290 = vld [vmem:[#allocation5 + $0x70] sm:$0xff]
        %v291 = vld [vmem:[#allocation5 + $0x78] sm:$0xff]
        %292 = vmatprep.subr.mxu0 0.0
        %293 = vmatpush1.msra.mxu0 %v276
        %294 = vmatprep.subr.mxu0 0.0
        %295 = vmatpush1.msra.mxu0 %v277
        %296 = vmatprep.subr.mxu0 0.0
        %297 = vmatpush1.msra.mxu0 %v278
        %298 = vmatprep.subr.mxu0 0.0
        %299 = vmatpush1.msra.mxu0 %v279
        %300 = vmatprep.subr.mxu0 0.0
        %301 = vmatpush1.msra.mxu0 %v280
        %302 = vmatprep.subr.mxu0 0.0
        %303 = vmatpush1.msra.mxu0 %v281
        %304 = vmatprep.subr.mxu0 0.0
        %305 = vmatpush1.msra.mxu0 %v282
        %306 = vmatprep.subr.mxu0 0.0
        %307 = vmatpush1.msra.mxu0 %v283
        %308 = vmatprep.subr.mxu0 0.0
        %309 = vmatpush1.msra.mxu0 %v284
        %310 = vmatprep.subr.mxu0 0.0
        %311 = vmatpush1.msra.mxu0 %v285
        %312 = vmatprep.subr.mxu0 0.0
        %313 = vmatpush1.msra.mxu0 %v286
        %314 = vmatprep.subr.mxu0 0.0
        %315 = vmatpush1.msra.mxu0 %v287
        %316 = vmatprep.subr.mxu0 0.0
        %317 = vmatpush1.msra.mxu0 %v288
        %318 = vmatprep.subr.mxu0 0.0
        %319 = vmatpush1.msra.mxu0 %v289
        %320 = vmatprep.subr.mxu0 0.0
        %321 = vmatpush1.msra.mxu0 %v290
        %322 = vmatprep.subr.mxu0 0.0
        %323 = vmatpush1.msra.mxu0 %v291
        %324 = vmatprep.subr.mxu0 0.0
        %325 = vmatpush1.msra.mxu0 0.0
        %326 = vmatprep.subr.mxu0 0.0
        %327 = vmatpush1.msra.mxu0 0.0
        %328 = vmatprep.subr.mxu0 0.0
        %329 = vmatpush1.msra.mxu0 0.0
        %330 = vmatprep.subr.mxu0 0.0
        %331 = vmatpush1.msra.mxu0 0.0
        %332 = vmatprep.subr.mxu0 0.0
        %333 = vmatpush1.msra.mxu0 0.0
        %334 = vmatprep.subr.mxu0 0.0
        %335 = vmatpush1.msra.mxu0 0.0
        %336 = vmatprep.subr.mxu0 0.0
        %337 = vmatpush1.msra.mxu0 0.0
        %338 = vmatprep.subr.mxu0 0.0
        %339 = vmatpush1.msra.mxu0 0.0
        %340 = vmatprep.subr.mxu0 0.0
        %341 = vmatpush1.msra.mxu0 0.0
        %342 = vmatprep.subr.mxu0 0.0
        %343 = vmatpush1.msra.mxu0 0.0
        %344 = vmatprep.subr.mxu0 0.0
        %345 = vmatpush1.msra.mxu0 0.0
        %346 = vmatprep.subr.mxu0 0.0
        %347 = vmatpush1.msra.mxu0 0.0
        %348 = vmatprep.subr.mxu0 0.0
        %349 = vmatpush1.msra.mxu0 0.0
        %350 = vmatprep.subr.mxu0 0.0
        %351 = vmatpush1.msra.mxu0 0.0
        %352 = vmatprep.subr.mxu0 0.0
        %353 = vmatpush1.msra.mxu0 0.0
        %354 = vmatprep.subr.mxu0 0.0
        %355 = vmatpush1.msra.mxu0 0.0
        %356 = vmatprep.mubr.f32.mxu0 0.0
        %357 = vmatmul.mubr.f32.gmra.mrb[0].mxu0 %v275
        %v358 = vpop.f32.mrb[0].mxu0
        %v359 = vadd.f32 0.0, %v358
        %v360 = vpop.f32.mrb[0].mxu0
        %361 = vdwg.mxu0
        %v362 = vld [vmem:[%s268] sm:$0xff]
        %v363 = vld [vmem:[#allocation7] sm:$0xff]
        %v364 = vld [vmem:[#allocation7 + $0x8] sm:$0xff]
        %v365 = vld [vmem:[#allocation7 + $0x10] sm:$0xff]
        %v366 = vld [vmem:[#allocation7 + $0x18] sm:$0xff]
        %v367 = vld [vmem:[#allocation7 + $0x20] sm:$0xff]
        %v368 = vld [vmem:[#allocation7 + $0x28] sm:$0xff]
        %v369 = vld [vmem:[#allocation7 + $0x30] sm:$0xff]
        %v370 = vld [vmem:[#allocation7 + $0x38] sm:$0xff]
        %v371 = vld [vmem:[#allocation7 + $0x40] sm:$0xff]
        %v372 = vld [vmem:[#allocation7 + $0x48] sm:$0xff]
        %v373 = vld [vmem:[#allocation7 + $0x50] sm:$0xff]
        %v374 = vld [vmem:[#allocation7 + $0x58] sm:$0xff]
        %v375 = vld [vmem:[#allocation7 + $0x60] sm:$0xff]
        %v376 = vld [vmem:[#allocation7 + $0x68] sm:$0xff]
        %v377 = vld [vmem:[#allocation7 + $0x70] sm:$0xff]
        %v378 = vld [vmem:[#allocation7 + $0x78] sm:$0xff]
        %379 = vmatprep.subr.mxu0 0.0
        %380 = vmatpush1.msra.mxu0 %v363
        %381 = vmatprep.subr.mxu0 0.0
        %382 = vmatpush1.msra.mxu0 %v364
        %383 = vmatprep.subr.mxu0 0.0
        %384 = vmatpush1.msra.mxu0 %v365
        %385 = vmatprep.subr.mxu0 0.0
        %386 = vmatpush1.msra.mxu0 %v366
        %387 = vmatprep.subr.mxu0 0.0
        %388 = vmatpush1.msra.mxu0 %v367
        %389 = vmatprep.subr.mxu0 0.0
        %390 = vmatpush1.msra.mxu0 %v368
        %391 = vmatprep.subr.mxu0 0.0
        %392 = vmatpush1.msra.mxu0 %v369
        %393 = vmatprep.subr.mxu0 0.0
        %394 = vmatpush1.msra.mxu0 %v370
        %395 = vmatprep.subr.mxu0 0.0
        %396 = vmatpush1.msra.mxu0 %v371
        %397 = vmatprep.subr.mxu0 0.0
        %398 = vmatpush1.msra.mxu0 %v372
        %399 = vmatprep.subr.mxu0 0.0
        %400 = vmatpush1.msra.mxu0 %v373
        %401 = vmatprep.subr.mxu0 0.0
        %402 = vmatpush1.msra.mxu0 %v374
        %403 = vmatprep.subr.mxu0 0.0
        %404 = vmatpush1.msra.mxu0 %v375
        %405 = vmatprep.subr.mxu0 0.0
        %406 = vmatpush1.msra.mxu0 %v376
        %407 = vmatprep.subr.mxu0 0.0
        %408 = vmatpush1.msra.mxu0 %v377
        %409 = vmatprep.subr.mxu0 0.0
        %410 = vmatpush1.msra.mxu0 %v378
        %411 = vmatprep.subr.mxu0 0.0
        %412 = vmatpush1.msra.mxu0 0.0
        %413 = vmatprep.subr.mxu0 0.0
        %414 = vmatpush1.msra.mxu0 0.0
        %415 = vmatprep.subr.mxu0 0.0
        %416 = vmatpush1.msra.mxu0 0.0
        %417 = vmatprep.subr.mxu0 0.0
        %418 = vmatpush1.msra.mxu0 0.0
        %419 = vmatprep.subr.mxu0 0.0
        %420 = vmatpush1.msra.mxu0 0.0
        %421 = vmatprep.subr.mxu0 0.0
        %422 = vmatpush1.msra.mxu0 0.0
        %423 = vmatprep.subr.mxu0 0.0
        %424 = vmatpush1.msra.mxu0 0.0
        %425 = vmatprep.subr.mxu0 0.0
        %426 = vmatpush1.msra.mxu0 0.0
        %427 = vmatprep.subr.mxu0 0.0
        %428 = vmatpush1.msra.mxu0 0.0
        %429 = vmatprep.subr.mxu0 0.0
        %430 = vmatpush1.msra.mxu0 0.0
        %431 = vmatprep.subr.mxu0 0.0
        %432 = vmatpush1.msra.mxu0 0.0
        %433 = vmatprep.subr.mxu0 0.0
        %434 = vmatpush1.msra.mxu0 0.0
        %435 = vmatprep.subr.mxu0 0.0
        %436 = vmatpush1.msra.mxu0 0.0
        %437 = vmatprep.subr.mxu0 0.0
        %438 = vmatpush1.msra.mxu0 0.0
        %439 = vmatprep.subr.mxu0 0.0
        %440 = vmatpush1.msra.mxu0 0.0
        %441 = vmatprep.subr.mxu0 0.0
        %442 = vmatpush1.msra.mxu0 0.0
        %443 = vmatprep.mubr.f32.mxu0 0.0
        %444 = vmatmul.mubr.f32.gmra.mrb[0].mxu0 %v359
        %v445 = vpop.f32.mrb[0].mxu0
        %v446 = vadd.f32 0.0, %v445
        %v447 = vpop.f32.mrb[0].mxu0
        %448 = vdwg.mxu0
        %v449 = vadd.f32 %v362, %v446
        %450 = vst [vmem:[%s268] sm:$0xff] %v449
        // Predicated region
        $region53: #{tpu_custom_call.1} parent=35 // pred_check
          %p451 = pneg %p270
        $region54: #{tpu_custom_call.1} parent=35 // pred_check_branch
          %453 = sbr.rel (%p451) target = $region56
        $region55: #{tpu_custom_call.1} parent=35 // pred_region
          %v454 = vld [vmem:[%s268] sm:$0xff]
          %v455 = vld [vmem:[%s3] sm:$0x1]
          %v457 = vlaneseq
          %v458 = vshrl.u32 %v457, 7
          %v459 = vsub.s32 0, %v458
          %v460 = vrot.slane %v455, %v459
          %v462 = vadd.f32 %v454, %v460
          %v463 = vmax.f32 %v462, 0.0
          %464 = vst [vmem:[%s268] sm:$0xff] %v463
        $region56: #{tpu_custom_call.1} parent=35 // pred_fallthru
          _
        %s465 = sand.u32 %s141, 1
        %s466 = scalar_lea.sflag [#allocation4], %s465
        %s467 = sand.u32 %s141, 1
        %s468 = smul.addr %s467, 8
        %s469 = scalar_lea.vmem [#allocation8], %s468
        // Predicated region
        $region57: #{tpu_custom_call.1} parent=35 // pred_check
          %p470 = pneg %p151
        $region58: #{tpu_custom_call.1} parent=35 // pred_check_branch
          %472 = sbr.rel (%p470) target = $region60
        $region59: #{tpu_custom_call.1} parent=35 // pred_region
          %s474 = ssub.s32 128, 128
          %475 = vsyncadd %s466, %s474
          %s476 = smul.addr %s26, 128
          %s477 = scalar_lea.hbm %s4, %s476
          %s479 = sshll.u32 %s469, 4
          %s480 = int_to_ptr.vmem [resolvable:$true] %s479
          %482 = dma.vmem_to_hbm [thread:$0]  %s480, 128, %s477, %s466
        $region60: #{tpu_custom_call.1} parent=35 // pred_fallthru
          _
      $region36: #{tpu_custom_call.1} parent=5 // pred_fallthru
        _
      %p483 = scmp.le.s32.totalorder 2, %s17
      // Predicated region
      $region61: #{tpu_custom_call.1} parent=5 // pred_check
        %p484 = pneg %p483
      $region62: #{tpu_custom_call.1} parent=5 // pred_check_branch
        %486 = sbr.rel (%p484) target = $region64
      $region63: #{tpu_custom_call.1} parent=5 // pred_region
        %s487 = ssub.s32 %s17, 2
        // Predicated region
        $region65: #{tpu_custom_call.1} parent=63 // pred_check
          %p488 = pneg %p157
        $region66: #{tpu_custom_call.1} parent=63 // pred_check_branch
          %490 = sbr.rel (%p488) target = $region68
        $region67: #{tpu_custom_call.1} parent=63 // pred_region
          %s491 = sand.u32 %s142, 1
          %s492 = scalar_lea.sflag [#allocation4], %s491
          %s493 = sand.u32 %s142, 1
          %s494 = smul.addr %s493, 8
          %s495 = scalar_lea.vmem [#allocation8], %s494
          %496 = dma.done %s492, 128
        $region68: #{tpu_custom_call.1} parent=63 // pred_fallthru
          _
      $region64: #{tpu_custom_call.1} parent=5 // pred_fallthru
        _
    $region6: #{tpu_custom_call.1} parent=1 // loop_footer
      %s21 = sadd.s32 1, %s17
    $region7: #{tpu_custom_call.1} parent=1 // loop_footer_branch
      %16 = sbr.rel target = $region3
    $region8: #{tpu_custom_call.1} parent=1 // loop_exit
      _
    %497 = vsyncpa [#allocation3], 1
    %s498 = scalar_lea.sflag [#allocation3], 1
    %499 = vsyncpa %s498, 1
    %500 = vsyncpa [#allocation6], 1
    %501 = vsyncpa [#allocation4], 1
    %s502 = scalar_lea.sflag [#allocation4], 1
    %503 = vsyncpa %s502, 1

</llo_original>
